<compile_context>
chip_gen: v5e
topology: v5e:2x2
jax: 0.10.0
libtpu: 0.0.40
codegen_flags: <defaults>
</compile_context>

<pallas_src>
import functools

import jax
import jax.numpy as jnp
from jax.experimental import pallas as pl
from jax.experimental.pallas import tpu as pltpu


# ---------------------------------------------------------------------------
# Kernel 1: support = x @ W_pad   (small projection, whole problem in VMEM)
# ---------------------------------------------------------------------------
def _support_kernel(x_ref, w_ref, o_ref):
    o_ref[...] = jnp.dot(x_ref[...], w_ref[...],
                         preferred_element_type=jnp.float32)


# ---------------------------------------------------------------------------
# Kernel 2 (row-tiled):  out = dropout(relu(A_tile @ S + S_tile + b))
#   Identity matrix eliminated algebraically: (A + I) @ S == A @ S + S.
# ---------------------------------------------------------------------------
def _gcn_row_kernel(adj_ref, sup_full_ref, sup_tile_ref, b_ref, bits_ref,
                    o_ref, *, p_drop):
    out = jnp.dot(adj_ref[...], sup_full_ref[...],
                  preferred_element_type=jnp.float32)
    out = out + sup_tile_ref[...] + b_ref[...]
    out = jnp.maximum(out, 0.0)                        # ReLU

    # Dropout (training mode), integer-domain threshold on uint32 bits.
    if p_drop >= 1.0:                                  # static (trace-time)
        o_ref[...] = jnp.zeros_like(out)
    elif p_drop > 0.0:
        threshold = jnp.uint32(int(p_drop * (1 << 32)))
        keep = bits_ref[...] >= threshold
        scale = 1.0 / (1.0 - p_drop)
        o_ref[...] = jnp.where(keep, out * scale, 0.0).astype(o_ref.dtype)
    else:
        o_ref[...] = out.astype(o_ref.dtype)


def _pick_row_tile(n, target=256):
    """Largest row tile <= target that is a multiple of 8 and divides N."""
    if n <= target:
        return n
    for tm in range((target // 8) * 8, 0, -8):
        if n % tm == 0:
            return tm
    return n


def gcn_forward(x, adj, weight, bias, key, p_drop):
    N, nfeat = x.shape
    nclass = weight.shape[1]
    assert adj.shape == (N, N)

    # Lane-dense padding: pad the class dim up to a multiple of 128 so the
    # matmul results and output stores are full-lane (unmasked vst).
    c_pad = ((nclass + 127) // 128) * 128
    w_pad = jnp.pad(weight.astype(jnp.float32), ((0, 0), (0, c_pad - nclass)))
    b_pad = jnp.pad(bias.astype(jnp.float32).reshape(1, -1),
                    ((0, 0), (0, c_pad - nclass)))

    # --- support = x @ W_pad (projection first: mem-bound-optimal order) ---
    support = pl.pallas_call(
        _support_kernel,
        out_shape=jax.ShapeDtypeStruct((N, c_pad), jnp.float32),
        in_specs=[pl.BlockSpec(memory_space=pltpu.MemorySpace.VMEM),
                  pl.BlockSpec(memory_space=pltpu.MemorySpace.VMEM)],
        out_specs=pl.BlockSpec(memory_space=pltpu.MemorySpace.VMEM),
    )(x.astype(jnp.float32), w_pad)

    # Dropout randomness from the standard JAX PRNG (portable, incl. interpret
    # mode); consumed inside the kernel with an integer compare.
    bits = jax.random.bits(key, (N, c_pad), dtype=jnp.uint32)

    # --- row-tiled (A + I) @ S + b, ReLU, dropout ---
    tm = _pick_row_tile(N)
    grid = (N // tm,)

    # Rough scoped-VMEM budget: double-buffered streamed tiles + residents.
    est = 4 * (2 * tm * N            # adj tile (f32, double buffered)
               + 3 * 2 * tm * c_pad  # support rows / bits / out tiles (x2)
               + N * c_pad           # resident full support
               + c_pad)              # bias
    vmem_limit = int(min(100 * 2**20, max(2 * est, 32 * 2**20)))

    kernel = functools.partial(_gcn_row_kernel, p_drop=float(p_drop))
    out_pad = pl.pallas_call(
        kernel,
        out_shape=jax.ShapeDtypeStruct((N, c_pad), jnp.float32),
        grid_spec=pltpu.PrefetchScalarGridSpec(
            num_scalar_prefetch=0,
            grid=grid,
            in_specs=[
                pl.BlockSpec((tm, N), lambda i: (i, 0)),      # adj row-tile
                pl.BlockSpec((N, c_pad), lambda i: (0, 0)),   # full support
                pl.BlockSpec((tm, c_pad), lambda i: (i, 0)),  # support rows
                pl.BlockSpec((1, c_pad), lambda i: (0, 0)),   # bias
                pl.BlockSpec((tm, c_pad), lambda i: (i, 0)),  # dropout bits
            ],
            out_specs=pl.BlockSpec((tm, c_pad), lambda i: (i, 0)),
        ),
        compiler_params=pltpu.CompilerParams(
            dimension_semantics=("parallel",),   # shard row-tiles across TCs
            vmem_limit_bytes=vmem_limit,
        ),
    )(adj.astype(jnp.float32), support, support, b_pad, bits)

    # Slice the padded classes off outside the kernel.
    return out_pad[:, :nclass]


if __name__ == "__main__":
    N, nfeat, nclass = 16, 32, 8
    dropout = 0.5

    key = jax.random.PRNGKey(0)
    kx, ka, kw, kb, kd = jax.random.split(key, 5)

    # inputs
    x = jax.random.normal(kx, (N, nfeat), dtype=jnp.float32)
    adj = (jax.random.uniform(ka, (N, N)) > 0.7).astype(jnp.float32)
    adj = jnp.maximum(adj, adj.T)  # symmetric adjacency

    # GraphConvolution params, Kipf-style uniform(-stdv, stdv)
    stdv = 1.0 / (nclass ** 0.5)
    weight = jax.random.uniform(kw, (nfeat, nclass), minval=-stdv, maxval=stdv,
                                dtype=jnp.float32)
    bias = jax.random.uniform(kb, (nclass,), minval=-stdv, maxval=stdv,
                              dtype=jnp.float32)

    out = gcn_forward(x, adj, weight, bias, kd, dropout)
    jax.block_until_ready(out)
    assert out.shape == (N, nclass) and out.dtype == jnp.float32
    assert bool(jnp.all(jnp.isfinite(out)))
    assert bool(jnp.all(out >= 0.0))  # relu (+ non-negative dropout scale)
    print("KERNEL_OK")
</pallas_src>

<mosaic_0001>
module attributes {stable_mosaic.version = 11 : i64} {
  func.func @_support_kernel(%arg0: memref<16x32xf32, #tpu.memory_space<vmem>>, %arg1: memref<32x128xf32, #tpu.memory_space<vmem>>, %arg2: memref<16x128xf32, #tpu.memory_space<vmem>>) attributes {dimension_semantics = [], scalar_prefetch = 0 : i64, scratch_operands = 0 : i64, tpu.core_type = #tpu.core_type<tc>} {
    %c0 = arith.constant 0 : index
    %c0_0 = arith.constant 0 : index
    %0 = vector.load %arg0[%c0, %c0_0] : memref<16x32xf32, #tpu.memory_space<vmem>>, vector<16x32xf32>
    %c0_1 = arith.constant 0 : index
    %c0_2 = arith.constant 0 : index
    %1 = vector.load %arg1[%c0_1, %c0_2] : memref<32x128xf32, #tpu.memory_space<vmem>>, vector<32x128xf32>
    %cst = arith.constant dense<0.000000e+00> : vector<16x128xf32>
    %2 = tpu.matmul %0, %1, %cst {dimension_numbers = #tpu.dot_dimension_numbers<[1], [0], [0], [1], [0, 0, 1, 1], [], []>} : vector<16x32xf32>, vector<32x128xf32>, vector<16x128xf32> -> vector<16x128xf32>
    %c0_3 = arith.constant 0 : index
    %c0_4 = arith.constant 0 : index
    %3 = vector.load %arg2[%c0_3, %c0_4] : memref<16x128xf32, #tpu.memory_space<vmem>>, vector<16x128xf32>
    tpu.vector_store %arg2[%c0_3, %c0_4], %2 {strides = array<i32>} : memref<16x128xf32, #tpu.memory_space<vmem>>, vector<16x128xf32>,
    return
  }
}

</mosaic_0001>

<llo_original>
// kernel: tpu_custom_call.1
$region0: #{tpu_custom_call.1}
  #allocation0 [shape = 'u32[]', space=smem, size = 0x4, offset = 0x4, fixed_abs, tag = 'smem constant byte address 0x4 - core index']
  #allocation1 [shape = 'u32[72,128]{1,0:T(1,128)}', space=vmem, size = 0x9000, scoped, tag = 'internal scratch']
  %s0 = inlined_call_operand.hbm [shape: f32[16,32], index: 0, kind: input, shape index: {}]
  %s1 = inlined_call_operand.hbm [shape: f32[32,128], index: 1, kind: input, shape index: {}]
  %s2 = inlined_call_operand.hbm [shape: f32[16,128], index: 2, kind: output, shape index: {}]
  %s3 = sld [smem:[#allocation0]]
  $region26: #{tpu_custom_call.1} parent=0
    _
  %s5 = ssub.s32 1, %s3
  %s6 = scalar_select 0, %s5, %s3
  $region1: #{tpu_custom_call.1} parent=0
    #allocation2 [shape = 'u8[8192]{0}', space=vmem, size = 0x2000, scoped, tag = 'input window, operand 0, single buffered']
    #allocation3 [shape = 's32[1]{0}', space=sflag, size = 0x4, scoped, tag = 'scoped memory for tpu_custom_call.1']
    #allocation4 [shape = 's32[1]{0}', space=sflag, size = 0x4, scoped, tag = 'scoped memory for tpu_custom_call.1']
    #allocation5 [shape = 'u8[16384]{0}', space=vmem, size = 0x4000, scoped, tag = 'input window, operand 1, single buffered']
    #allocation6 [shape = 's32[1]{0}', space=sflag, size = 0x4, scoped, tag = 'scoped memory for tpu_custom_call.1']
    #allocation7 [shape = 'u8[8192]{0}', space=vmem, size = 0x2000, scoped, tag = 'output window, operand 0, single buffered']
    %7 = vsyncpa [#allocation3], 0
    %8 = vsyncpa [#allocation6], 0
    %9 = vsyncpa [#allocation4], 0
    // Predicated region
    $region2: #{tpu_custom_call.1} parent=1 // pred_check
      _
    $region3: #{tpu_custom_call.1} parent=1 // pred_check_branch
      %11 = sbr.rel (0) target = $region5
    $region4: #{tpu_custom_call.1} parent=1 // pred_region
      %13 = vsyncadd [#allocation3], 0
      %s14 = sshll.u32 %s0, 4
      %s15 = int_to_ptr.hbm [resolvable:$true] %s14
      %s16 = sshll.u32 [#allocation2], 4
      %s17 = int_to_ptr.vmem [resolvable:$true] %s16
      %22 = dma.hbm_to_vmem [thread:$0]  %s15, 256, %s17, [#allocation3], 128, 128, 8
    $region5: #{tpu_custom_call.1} parent=1 // pred_fallthru
      _
    // Predicated region
    $region6: #{tpu_custom_call.1} parent=1 // pred_check
      _
    $region7: #{tpu_custom_call.1} parent=1 // pred_check_branch
      %24 = sbr.rel (0) target = $region9
    $region8: #{tpu_custom_call.1} parent=1 // pred_region
      %26 = vsyncadd [#allocation6], 0
      %s27 = sshll.u32 %s1, 4
      %s28 = int_to_ptr.hbm [resolvable:$true] %s27
      %s29 = sshll.u32 [#allocation5], 4
      %s30 = int_to_ptr.vmem [resolvable:$true] %s29
      %35 = dma.hbm_to_vmem [thread:$0]  %s28, 512, %s30, [#allocation6], 128, 128, 8
    $region9: #{tpu_custom_call.1} parent=1 // pred_fallthru
      _
    // Predicated region
    $region10: #{tpu_custom_call.1} parent=1 // pred_check
      _
    $region11: #{tpu_custom_call.1} parent=1 // pred_check_branch
      %37 = sbr.rel (0) target = $region13
    $region12: #{tpu_custom_call.1} parent=1 // pred_region
      %39 = dma.done [#allocation3], 256
    $region13: #{tpu_custom_call.1} parent=1 // pred_fallthru
      _
    // Predicated region
    $region14: #{tpu_custom_call.1} parent=1 // pred_check
      _
    $region15: #{tpu_custom_call.1} parent=1 // pred_check_branch
      %41 = sbr.rel (0) target = $region17
    $region16: #{tpu_custom_call.1} parent=1 // pred_region
      %43 = dma.done [#allocation6], 512
    $region17: #{tpu_custom_call.1} parent=1 // pred_fallthru
      _
    %v44 = vld [vmem:[#allocation2] sm:$0xff]
    %v45 = vld [vmem:[#allocation2 + $0x8] sm:$0xff]
    %v46 = vld [vmem:[#allocation5] sm:$0xff]
    %v47 = vld [vmem:[#allocation5 + $0x8] sm:$0xff]
    %v48 = vld [vmem:[#allocation5 + $0x10] sm:$0xff]
    %v49 = vld [vmem:[#allocation5 + $0x18] sm:$0xff]
    %vm50 = vcmask 261120
    %v52 = vsel %vm50, %v44, 0
    %v55 = vsel %vm50, %v45, 0
    %57 = vmatpush.msra.mxu0 0.0
    %58 = vmatpush.msra.mxu0 0.0
    %59 = vmatpush.msra.mxu0 0.0
    %60 = vmatpush.msra.mxu0 0.0
    %61 = vmatpush.msra.mxu0 0.0
    %62 = vmatpush.msra.mxu0 0.0
    %63 = vmatpush.msra.mxu0 0.0
    %64 = vmatpush.msra.mxu0 0.0
    %65 = vmatpush.msra.mxu0 0.0
    %66 = vmatpush.msra.mxu0 0.0
    %67 = vmatpush.msra.mxu0 0.0
    %68 = vmatpush.msra.mxu0 0.0
    %69 = vmatpush.msra.mxu0 %v49
    %70 = vmatpush.msra.mxu0 %v48
    %71 = vmatpush.msra.mxu0 %v47
    %72 = vmatpush.msra.mxu0 %v46
    %73 = vmatmul.f32.gmra.mxu0 %v52
    %v74 = vpop.f32.mrf.mxu0
    %v75 = vadd.f32 0.0, %v74
    %76 = vmatmul.f32.gmra.mxu0 %v55
    %v77 = vpop.f32.mrf.mxu0
    %v78 = vadd.f32 0.0, %v77
    %79 = vdwg.mxu0
    %80 = vst [vmem:[#allocation7] sm:$0xff] %v75
    %81 = vst [vmem:[#allocation7 + $0x8] sm:$0xff] %v78
    // Predicated region
    $region18: #{tpu_custom_call.1} parent=1 // pred_check
      _
    $region19: #{tpu_custom_call.1} parent=1 // pred_check_branch
      %83 = sbr.rel (0) target = $region21
    $region20: #{tpu_custom_call.1} parent=1 // pred_region
      %85 = vsyncadd [#allocation4], 0
      %s86 = sshll.u32 [#allocation7], 4
      %s87 = int_to_ptr.vmem [resolvable:$true] %s86
      %s88 = sshll.u32 %s2, 4
      %s89 = int_to_ptr.hbm [resolvable:$true] %s88
      %94 = dma.vmem_to_hbm [thread:$0]  %s87, 256, %s89, [#allocation4], 128, 128, 8
    $region21: #{tpu_custom_call.1} parent=1 // pred_fallthru
      _
    // Predicated region
    $region22: #{tpu_custom_call.1} parent=1 // pred_check
      _
    $region23: #{tpu_custom_call.1} parent=1 // pred_check_branch
      %96 = sbr.rel (0) target = $region25
    $region24: #{tpu_custom_call.1} parent=1 // pred_region
      %98 = dma.done [#allocation4], 256
    $region25: #{tpu_custom_call.1} parent=1 // pred_fallthru
      _
    %99 = vsyncpa [#allocation3], 1
    %100 = vsyncpa [#allocation6], 1
    %101 = vsyncpa [#allocation4], 1

</llo_original>
